<compile_context>
chip_gen: v7x
topology: tpu7x:2x2x1
jax: 0.10.0
libtpu: 0.0.40
codegen_flags: <defaults>
</compile_context>

<pallas_src>
import functools

import jax
import jax.numpy as jnp
from jax.experimental import pallas as pl
from jax.experimental.pallas import tpu as pltpu


def _round_up(n, m):
    return ((n + m - 1) // m) * m


def _cdiv(a, b):
    return (a + b - 1) // b


def _mlp_kernel(x_ref, w1_ref, b1_ref, w2_ref, b2_ref,
                w3_ref, b3_ref, wc_ref, bc_ref, out_ref):
    # x and all weights are bf16; every matmul accumulates in f32 on the MXU.
    x = x_ref[...]

    # fc1 + ReLU
    h1 = jnp.dot(x, w1_ref[...], preferred_element_type=jnp.float32) + b1_ref[...]
    h1 = jnp.maximum(h1, 0.0)

    # fc2 + ReLU
    h2 = jnp.dot(h1.astype(w2_ref.dtype), w2_ref[...],
                 preferred_element_type=jnp.float32) + b2_ref[...]
    h2 = jnp.maximum(h2, 0.0)

    # fc3 -> embeddings
    emb = jnp.dot(h2.astype(w3_ref.dtype), w3_ref[...],
                  preferred_element_type=jnp.float32) + b3_ref[...]

    # F.normalize(p=2, dim=-1): x / max(||x||, 1e-12) == x * rsqrt(max(sum x^2, 1e-24))
    sq = jnp.sum(emb * emb, axis=-1, keepdims=True)
    emb_n = emb * jax.lax.rsqrt(jnp.maximum(sq, 1e-24))

    # classifier -> logits (last dim = true num_classes; no lane padding)
    out_ref[...] = (jnp.dot(emb_n.astype(wc_ref.dtype), wc_ref[...],
                            preferred_element_type=jnp.float32) + bc_ref[...])


def _forward(x, params, *, block_b=1024):
    """x: (B, input_dim). params: output of prepare_params (bf16 W, f32 b)."""
    B, input_dim = x.shape
    w1, b1 = params["w1"], params["b1"]
    w2, b2 = params["w2"], params["b2"]
    w3, b3 = params["w3"], params["b3"]
    wc, bc = params["wc"], params["bc"]
    d_h1, d_h2, d_e = w1.shape[1], w2.shape[1], w3.shape[1]
    num_classes = wc.shape[1]

    # Batch tiling: minimize padding; TB multiple of 16 (bf16 sublane packing);
    # force >=2 grid steps when the batch allows it so v7x's 2nd TC gets work.
    n_steps = max(_cdiv(B, block_b), 2 if B >= 32 else 1)
    TB = _round_up(_cdiv(B, n_steps), 16)
    Bp = n_steps * TB
    grid = (n_steps,)

    xb = x.astype(jnp.bfloat16)
    if Bp != B:
        xb = jnp.pad(xb, ((0, Bp - B), (0, 0)))

    def moving_spec(shape):            # tiles that move with the batch grid index
        return pl.BlockSpec(shape, lambda i: (i, 0))

    def resident_spec(shape):          # constant block -> DMA once, single-buffered
        return pl.BlockSpec(shape, lambda i: (0, 0),
                            pipeline_mode=pl.Buffered(1))

    # VMEM budget estimate (bytes): resident weights/biases + double-buffered
    # moving x/out tiles + f32 intermediates, with 2x headroom. Keep below
    # v7x's 64 MiB physical VMEM.
    weight_bytes = sum(int(w.size) * 2 for w in (w1, w2, w3, wc)) \
        + sum(int(b.size) * 4 for b in (b1, b2, b3, bc))
    moving_bytes = 2 * TB * input_dim * 2 + 2 * TB * num_classes * 4
    interm_bytes = 2 * TB * (d_h1 + d_h2 + d_e + num_classes) * 4
    vmem_limit = int(min(56 * 1024 * 1024,
                         max(32 * 1024 * 1024,
                             2 * (weight_bytes + moving_bytes + interm_bytes))))

    flops = 2 * Bp * (input_dim * d_h1 + d_h1 * d_h2 + d_h2 * d_e
                      + d_e * num_classes)
    bytes_accessed = int(xb.size * 2 + weight_bytes + Bp * num_classes * 4)

    out = pl.pallas_call(
        _mlp_kernel,
        out_shape=jax.ShapeDtypeStruct((Bp, num_classes), jnp.float32),
        grid=grid,
        in_specs=[
            moving_spec((TB, input_dim)),
            resident_spec(w1.shape), resident_spec(b1.shape),
            resident_spec(w2.shape), resident_spec(b2.shape),
            resident_spec(w3.shape), resident_spec(b3.shape),
            resident_spec(wc.shape), resident_spec(bc.shape),
        ],
        out_specs=moving_spec((TB, num_classes)),
        compiler_params=pltpu.CompilerParams(
            dimension_semantics=("parallel",),
            vmem_limit_bytes=vmem_limit),
        cost_estimate=pl.CostEstimate(
            flops=flops, transcendentals=Bp, bytes_accessed=bytes_accessed),
    )(xb, w1, b1, w2, b2, w3, b3, wc, bc)

    if Bp != B:
        out = out[:B]
    return out


# Jitted entry point (keeps the per-call wrapper work fused / off the hot path).
neural_network_forward = jax.jit(_forward, static_argnames=("block_b",))


def prepare_params(params):
    """One-time prep: bf16 matmul weights, f32 biases shaped (1, out)."""
    out = {}
    for name in ("1", "2", "3", "c"):
        out[f"w{name}"] = jnp.asarray(params[f"w{name}"], jnp.bfloat16)
        out[f"b{name}"] = jnp.asarray(params[f"b{name}"], jnp.float32).reshape(1, -1)
    return out


def init_params(key, input_dim, embedding_dim, num_classes):
    """Deterministic init mimicking nn.Linear's U(-1/sqrt(fan_in), 1/sqrt(fan_in))."""
    dims = [(input_dim, 64), (64, 128), (128, embedding_dim),
            (embedding_dim, num_classes)]
    names = ["1", "2", "3", "c"]
    params = {}
    for (fan_in, fan_out), name in zip(dims, names):
        key, kw, kb = jax.random.split(key, 3)
        bound = 1.0 / jnp.sqrt(jnp.asarray(fan_in, jnp.float32))
        params[f"w{name}"] = jax.random.uniform(
            kw, (fan_in, fan_out), jnp.float32, -bound, bound)
        params[f"b{name}"] = jax.random.uniform(
            kb, (1, fan_out), jnp.float32, -bound, bound)
    return params


if __name__ == "__main__":
    key = jax.random.PRNGKey(0)
    batch, input_dim, embedding_dim, num_classes = 8, 32, 32, 8

    k_params, k_x = jax.random.split(key)
    raw_params = init_params(k_params, input_dim, embedding_dim, num_classes)
    params = prepare_params(raw_params)          # one-time, outside the hot path
    x = jax.random.normal(k_x, (batch, input_dim), jnp.float32)

    logits = neural_network_forward(x, params)
    jax.block_until_ready(logits)

    # Sanity check against a pure-f32 JAX reference of the same forward pass.
    # Tolerance is loosened for the bf16-operand / f32-accumulation matmuls.
    def ref(x, p):
        h1 = jax.nn.relu(x @ p["w1"] + p["b1"])
        h2 = jax.nn.relu(h1 @ p["w2"] + p["b2"])
        emb = h2 @ p["w3"] + p["b3"]
        n = jnp.sqrt(jnp.sum(emb * emb, axis=-1, keepdims=True))
        emb_n = emb / jnp.maximum(n, 1e-12)
        return emb_n @ p["wc"] + p["bc"]

    expected = ref(x, raw_params)
    assert logits.shape == (batch, num_classes)
    assert jnp.allclose(logits, expected, atol=5e-2, rtol=5e-2), (
        float(jnp.max(jnp.abs(logits - expected))))

    print("KERNEL_OK")
</pallas_src>

<mosaic_0001>
module attributes {stable_mosaic.version = 11 : i64} {
  func.func @_mlp_kernel(%arg0: i32, %arg1: memref<16x32xbf16, #tpu.memory_space<vmem>>, %arg2: memref<32x64xbf16, #tpu.memory_space<vmem>>, %arg3: memref<1x64xf32, #tpu.memory_space<vmem>>, %arg4: memref<64x128xbf16, #tpu.memory_space<vmem>>, %arg5: memref<1x128xf32, #tpu.memory_space<vmem>>, %arg6: memref<128x32xbf16, #tpu.memory_space<vmem>>, %arg7: memref<1x32xf32, #tpu.memory_space<vmem>>, %arg8: memref<32x8xbf16, #tpu.memory_space<vmem>>, %arg9: memref<1x8xf32, #tpu.memory_space<vmem>>, %arg10: memref<16x8xf32, #tpu.memory_space<vmem>>) attributes {dimension_semantics = [#tpu.dimension_semantics<parallel>], iteration_bounds = array<i64: 1>, scalar_prefetch = 0 : i64, scratch_operands = 0 : i64, tpu.core_type = #tpu.core_type<tc>, window_params = [{transform_indices = @transform_0, window_bounds = array<i64: 16, 32>}, {pipeline_mode = #tpu.pipeline_mode<synchronous>, transform_indices = @transform_1, window_bounds = array<i64: 32, 64>}, {pipeline_mode = #tpu.pipeline_mode<synchronous>, transform_indices = @transform_2, window_bounds = array<i64: 1, 64>}, {pipeline_mode = #tpu.pipeline_mode<synchronous>, transform_indices = @transform_3, window_bounds = array<i64: 64, 128>}, {pipeline_mode = #tpu.pipeline_mode<synchronous>, transform_indices = @transform_4, window_bounds = array<i64: 1, 128>}, {pipeline_mode = #tpu.pipeline_mode<synchronous>, transform_indices = @transform_5, window_bounds = array<i64: 128, 32>}, {pipeline_mode = #tpu.pipeline_mode<synchronous>, transform_indices = @transform_6, window_bounds = array<i64: 1, 32>}, {pipeline_mode = #tpu.pipeline_mode<synchronous>, transform_indices = @transform_7, window_bounds = array<i64: 32, 8>}, {pipeline_mode = #tpu.pipeline_mode<synchronous>, transform_indices = @transform_8, window_bounds = array<i64: 1, 8>}, {transform_indices = @transform_9, window_bounds = array<i64: 16, 8>}]} {
    %c0 = arith.constant 0 : index
    %c0_0 = arith.constant 0 : index
    %0 = vector.load %arg1[%c0, %c0_0] : memref<16x32xbf16, #tpu.memory_space<vmem>>, vector<16x32xbf16>
    %c0_1 = arith.constant 0 : index
    %c0_2 = arith.constant 0 : index
    %1 = vector.load %arg2[%c0_1, %c0_2] : memref<32x64xbf16, #tpu.memory_space<vmem>>, vector<32x64xbf16>
    %cst = arith.constant dense<0.000000e+00> : vector<16x64xf32>
    %2 = tpu.matmul %0, %1, %cst {dimension_numbers = #tpu.dot_dimension_numbers<[1], [0], [0], [1], [0, 0, 1, 1], [], []>} : vector<16x32xbf16>, vector<32x64xbf16>, vector<16x64xf32> -> vector<16x64xf32>
    %c0_3 = arith.constant 0 : index
    %c0_4 = arith.constant 0 : index
    %3 = vector.load %arg3[%c0_3, %c0_4] : memref<1x64xf32, #tpu.memory_space<vmem>>, vector<1x64xf32>
    %4 = vector.broadcast %3 : vector<1x64xf32> to vector<16x64xf32>
    %5 = arith.addf %2, %4 : vector<16x64xf32>
    %cst_5 = arith.constant 0.000000e+00 : f32
    %6 = vector.broadcast %cst_5 : f32 to vector<16x64xf32>
    %7 = arith.maximumf %5, %6 : vector<16x64xf32>
    %8 = arith.truncf %7 : vector<16x64xf32> to vector<16x64xbf16>
    %c0_6 = arith.constant 0 : index
    %c0_7 = arith.constant 0 : index
    %9 = vector.load %arg4[%c0_6, %c0_7] : memref<64x128xbf16, #tpu.memory_space<vmem>>, vector<64x128xbf16>
    %cst_8 = arith.constant dense<0.000000e+00> : vector<16x128xf32>
    %10 = tpu.matmul %8, %9, %cst_8 {dimension_numbers = #tpu.dot_dimension_numbers<[1], [0], [0], [1], [0, 0, 1, 1], [], []>} : vector<16x64xbf16>, vector<64x128xbf16>, vector<16x128xf32> -> vector<16x128xf32>
    %c0_9 = arith.constant 0 : index
    %c0_10 = arith.constant 0 : index
    %11 = vector.load %arg5[%c0_9, %c0_10] : memref<1x128xf32, #tpu.memory_space<vmem>>, vector<1x128xf32>
    %12 = vector.broadcast %11 : vector<1x128xf32> to vector<16x128xf32>
    %13 = arith.addf %10, %12 : vector<16x128xf32>
    %cst_11 = arith.constant 0.000000e+00 : f32
    %14 = vector.broadcast %cst_11 : f32 to vector<16x128xf32>
    %15 = arith.maximumf %13, %14 : vector<16x128xf32>
    %16 = arith.truncf %15 : vector<16x128xf32> to vector<16x128xbf16>
    %c0_12 = arith.constant 0 : index
    %c0_13 = arith.constant 0 : index
    %17 = vector.load %arg6[%c0_12, %c0_13] : memref<128x32xbf16, #tpu.memory_space<vmem>>, vector<128x32xbf16>
    %cst_14 = arith.constant dense<0.000000e+00> : vector<16x32xf32>
    %18 = tpu.matmul %16, %17, %cst_14 {dimension_numbers = #tpu.dot_dimension_numbers<[1], [0], [0], [1], [0, 0, 1, 1], [], []>} : vector<16x128xbf16>, vector<128x32xbf16>, vector<16x32xf32> -> vector<16x32xf32>
    %c0_15 = arith.constant 0 : index
    %c0_16 = arith.constant 0 : index
    %19 = vector.load %arg7[%c0_15, %c0_16] : memref<1x32xf32, #tpu.memory_space<vmem>>, vector<1x32xf32>
    %20 = vector.broadcast %19 : vector<1x32xf32> to vector<16x32xf32>
    %21 = arith.addf %18, %20 : vector<16x32xf32>
    %22 = arith.mulf %21, %21 : vector<16x32xf32>
    %cst_17 = arith.constant dense<0.000000e+00> : vector<16xf32>
    %23 = vector.multi_reduction <add>, %22, %cst_17 [1] : vector<16x32xf32> to vector<16xf32>
    %24 = vector.shape_cast %23 : vector<16xf32> to vector<16x1xf32>
    %cst_18 = arith.constant 1.000000e-24 : f32
    %25 = vector.broadcast %cst_18 : f32 to vector<16x1xf32>
    %26 = arith.maximumf %24, %25 : vector<16x1xf32>
    %27 = math.rsqrt %26 : vector<16x1xf32>
    %28 = vector.broadcast %27 : vector<16x1xf32> to vector<16x32xf32>
    %29 = arith.mulf %21, %28 : vector<16x32xf32>
    %30 = arith.truncf %29 : vector<16x32xf32> to vector<16x32xbf16>
    %c0_19 = arith.constant 0 : index
    %c0_20 = arith.constant 0 : index
    %31 = vector.load %arg8[%c0_19, %c0_20] : memref<32x8xbf16, #tpu.memory_space<vmem>>, vector<32x8xbf16>
    %cst_21 = arith.constant dense<0.000000e+00> : vector<16x8xf32>
    %32 = tpu.matmul %30, %31, %cst_21 {dimension_numbers = #tpu.dot_dimension_numbers<[1], [0], [0], [1], [0, 0, 1, 1], [], []>} : vector<16x32xbf16>, vector<32x8xbf16>, vector<16x8xf32> -> vector<16x8xf32>
    %c0_22 = arith.constant 0 : index
    %c0_23 = arith.constant 0 : index
    %33 = vector.load %arg9[%c0_22, %c0_23] : memref<1x8xf32, #tpu.memory_space<vmem>>, vector<1x8xf32>
    %34 = vector.broadcast %33 : vector<1x8xf32> to vector<16x8xf32>
    %35 = arith.addf %32, %34 : vector<16x8xf32>
    %c0_24 = arith.constant 0 : index
    %c0_25 = arith.constant 0 : index
    %36 = vector.load %arg10[%c0_24, %c0_25] : memref<16x8xf32, #tpu.memory_space<vmem>>, vector<16x8xf32>
    tpu.vector_store %arg10[%c0_24, %c0_25], %35 {strides = array<i32>} : memref<16x8xf32, #tpu.memory_space<vmem>>, vector<16x8xf32>,
    return
  }
  func.func @transform_0(%arg0: i32) -> (i32, i32) {
    %c0_i32 = arith.constant 0 : i32
    %c0_i32_0 = arith.constant 0 : i32
    return %arg0, %c0_i32 : i32, i32
  }
  func.func @transform_1(%arg0: i32) -> (i32, i32) {
    %c0_i32 = arith.constant 0 : i32
    %c0_i32_0 = arith.constant 0 : i32
    %c0_i32_1 = arith.constant 0 : i32
    return %c0_i32, %c0_i32_0 : i32, i32
  }
  func.func @transform_2(%arg0: i32) -> (i32, i32) {
    %c0_i32 = arith.constant 0 : i32
    %c0_i32_0 = arith.constant 0 : i32
    %c0_i32_1 = arith.constant 0 : i32
    return %c0_i32, %c0_i32_0 : i32, i32
  }
  func.func @transform_3(%arg0: i32) -> (i32, i32) {
    %c0_i32 = arith.constant 0 : i32
    %c0_i32_0 = arith.constant 0 : i32
    %c0_i32_1 = arith.constant 0 : i32
    return %c0_i32, %c0_i32_0 : i32, i32
  }
  func.func @transform_4(%arg0: i32) -> (i32, i32) {
    %c0_i32 = arith.constant 0 : i32
    %c0_i32_0 = arith.constant 0 : i32
    %c0_i32_1 = arith.constant 0 : i32
    return %c0_i32, %c0_i32_0 : i32, i32
  }
  func.func @transform_5(%arg0: i32) -> (i32, i32) {
    %c0_i32 = arith.constant 0 : i32
    %c0_i32_0 = arith.constant 0 : i32
    %c0_i32_1 = arith.constant 0 : i32
    return %c0_i32, %c0_i32_0 : i32, i32
  }
  func.func @transform_6(%arg0: i32) -> (i32, i32) {
    %c0_i32 = arith.constant 0 : i32
    %c0_i32_0 = arith.constant 0 : i32
    %c0_i32_1 = arith.constant 0 : i32
    return %c0_i32, %c0_i32_0 : i32, i32
  }
  func.func @transform_7(%arg0: i32) -> (i32, i32) {
    %c0_i32 = arith.constant 0 : i32
    %c0_i32_0 = arith.constant 0 : i32
    %c0_i32_1 = arith.constant 0 : i32
    return %c0_i32, %c0_i32_0 : i32, i32
  }
  func.func @transform_8(%arg0: i32) -> (i32, i32) {
    %c0_i32 = arith.constant 0 : i32
    %c0_i32_0 = arith.constant 0 : i32
    %c0_i32_1 = arith.constant 0 : i32
    return %c0_i32, %c0_i32_0 : i32, i32
  }
  func.func @transform_9(%arg0: i32) -> (i32, i32) {
    %c0_i32 = arith.constant 0 : i32
    %c0_i32_0 = arith.constant 0 : i32
    return %arg0, %c0_i32 : i32, i32
  }
}

</mosaic_0001>

<llo_original>
// kernel: _forward.1
$region0: #{_forward.1}
  #allocation0 [shape = 'u32[]', space=smem, size = 0x4, offset = 0x4, fixed_abs, tag = 'smem constant byte address 0x4 - core index']
  #allocation1 [shape = 'u32[144,128]{1,0:T(1,128)}', space=vmem, size = 0x12000, scoped, tag = 'internal scratch']
  %s0 = inlined_call_operand.vmem [shape: bf16[16,32], index: 0, kind: input, shape index: {}]
  %s1 = inlined_call_operand.vmem [shape: bf16[32,64], index: 1, kind: input, shape index: {}]
  %s2 = inlined_call_operand.vmem [shape: f32[1,64], index: 2, kind: input, shape index: {}]
  %s3 = inlined_call_operand.vmem [shape: bf16[64,128], index: 3, kind: input, shape index: {}]
  %s4 = inlined_call_operand.vmem [shape: f32[1,128], index: 4, kind: input, shape index: {}]
  %s5 = inlined_call_operand.vmem [shape: bf16[128,32], index: 5, kind: input, shape index: {}]
  %s6 = inlined_call_operand.vmem [shape: f32[1,32], index: 6, kind: input, shape index: {}]
  %s7 = inlined_call_operand.vmem [shape: bf16[32,8], index: 7, kind: input, shape index: {}]
  %s8 = inlined_call_operand.vmem [shape: f32[1,8], index: 8, kind: input, shape index: {}]
  %s9 = inlined_call_operand.vmem [shape: f32[16,8], index: 9, kind: output, shape index: {}]
  %s10 = sld [smem:[#allocation0]]
  $region46: #{_forward.1} parent=0
    _
  %s12 = ssub.s32 1, %s10
  %s13 = scalar_select 0, %s12, %s10
  // Predicated region
  $region2: #{_forward.1} parent=0 // pred_check
    _
  $region3: #{_forward.1} parent=0 // pred_check_branch
    %15 = sbr.rel (0) target = $region5
  $region4: #{_forward.1} parent=0 // pred_region
    _
  $region5: #{_forward.1} parent=0 // pred_fallthru
    _
  // Predicated region
  $region6: #{_forward.1} parent=0 // pred_check
    _
  $region7: #{_forward.1} parent=0 // pred_check_branch
    %17 = sbr.rel (0) target = $region9
  $region8: #{_forward.1} parent=0 // pred_region
    _
  $region9: #{_forward.1} parent=0 // pred_fallthru
    _
  // Predicated region
  $region10: #{_forward.1} parent=0 // pred_check
    _
  $region11: #{_forward.1} parent=0 // pred_check_branch
    %19 = sbr.rel (0) target = $region13
  $region12: #{_forward.1} parent=0 // pred_region
    _
  $region13: #{_forward.1} parent=0 // pred_fallthru
    _
  // Predicated region
  $region14: #{_forward.1} parent=0 // pred_check
    _
  $region15: #{_forward.1} parent=0 // pred_check_branch
    %21 = sbr.rel (0) target = $region17
  $region16: #{_forward.1} parent=0 // pred_region
    _
  $region17: #{_forward.1} parent=0 // pred_fallthru
    _
  // Predicated region
  $region18: #{_forward.1} parent=0 // pred_check
    _
  $region19: #{_forward.1} parent=0 // pred_check_branch
    %23 = sbr.rel (0) target = $region21
  $region20: #{_forward.1} parent=0 // pred_region
    _
  $region21: #{_forward.1} parent=0 // pred_fallthru
    _
  // Predicated region
  $region22: #{_forward.1} parent=0 // pred_check
    _
  $region23: #{_forward.1} parent=0 // pred_check_branch
    %25 = sbr.rel (0) target = $region25
  $region24: #{_forward.1} parent=0 // pred_region
    _
  $region25: #{_forward.1} parent=0 // pred_fallthru
    _
  // Predicated region
  $region26: #{_forward.1} parent=0 // pred_check
    _
  $region27: #{_forward.1} parent=0 // pred_check_branch
    %27 = sbr.rel (0) target = $region29
  $region28: #{_forward.1} parent=0 // pred_region
    _
  $region29: #{_forward.1} parent=0 // pred_fallthru
    _
  // Predicated region
  $region30: #{_forward.1} parent=0 // pred_check
    _
  $region31: #{_forward.1} parent=0 // pred_check_branch
    %29 = sbr.rel (0) target = $region33
  $region32: #{_forward.1} parent=0 // pred_region
    _
  $region33: #{_forward.1} parent=0 // pred_fallthru
    _
  // Predicated region
  $region34: #{_forward.1} parent=0 // pred_check
    _
  $region35: #{_forward.1} parent=0 // pred_check_branch
    %31 = sbr.rel (0) target = $region37
  $region36: #{_forward.1} parent=0 // pred_region
    _
  $region37: #{_forward.1} parent=0 // pred_fallthru
    _
  %v33 = vld [vmem:[%s0] sm:$0xf]
  %v34 = vld [vmem:[%s0 + $0x4] sm:$0xf]
  %v35 = vld [vmem:[%s1] sm:$0xf]
  %v36 = vld [vmem:[%s1 + $0x4] sm:$0xf]
  %v37 = vld [vmem:[%s1 + $0x8] sm:$0xf]
  %v38 = vld [vmem:[%s1 + $0xc] sm:$0xf]
  %v39 = vld [vmem:[%s2] sm:$0x1]
  %v41 = vlaneseq
  %v42 = vshrl.u32 %v41, 7
  %v43 = vsub.s32 0, %v42
  %v44 = vrot.slane %v39, %v43
  %v48 = vunpack.c.l.b16 %v33
  %v49 = vunpack.c.l.b16 %v34
  %v50 = vpack.c.b16 %v49, %v48
  %v55 = vunpack.c.l.b16 %v35
  %v56 = vunpack.c.l.b16 %v36
  %v57 = vunpack.c.l.b16 %v37
  %v58 = vunpack.c.l.b16 %v38
  %v59 = vpack.c.b16 %v56, %v55
  %v60 = vpack.c.b16 %v58, %v57
  %vm63 = vcmask 261120
  %v65 = vsel %vm63, %v50, 0
  %67 = vmatprep.subr.bf16.mxu0 0
  %68 = vmatpush1.bf16.msra.mxu0 %v59
  %69 = vmatprep.subr.bf16.mxu0 0
  %70 = vmatpush1.bf16.msra.mxu0 %v60
  %71 = vmatprep.subr.bf16.mxu0 0
  %72 = vmatpush1.bf16.msra.mxu0 0
  %73 = vmatprep.subr.bf16.mxu0 0
  %74 = vmatpush1.bf16.msra.mxu0 0
  %75 = vmatprep.subr.bf16.mxu0 0
  %76 = vmatpush1.bf16.msra.mxu0 0
  %77 = vmatprep.subr.bf16.mxu0 0
  %78 = vmatpush1.bf16.msra.mxu0 0
  %79 = vmatprep.subr.bf16.mxu0 0
  %80 = vmatpush1.bf16.msra.mxu0 0
  %81 = vmatprep.subr.bf16.mxu0 0
  %82 = vmatpush1.bf16.msra.mxu0 0
  %83 = vmatprep.subr.bf16.mxu0 0
  %84 = vmatpush1.bf16.msra.mxu0 0
  %85 = vmatprep.subr.bf16.mxu0 0
  %86 = vmatpush1.bf16.msra.mxu0 0
  %87 = vmatprep.subr.bf16.mxu0 0
  %88 = vmatpush1.bf16.msra.mxu0 0
  %89 = vmatprep.subr.bf16.mxu0 0
  %90 = vmatpush1.bf16.msra.mxu0 0
  %91 = vmatprep.subr.bf16.mxu0 0
  %92 = vmatpush1.bf16.msra.mxu0 0
  %93 = vmatprep.subr.bf16.mxu0 0
  %94 = vmatpush1.bf16.msra.mxu0 0
  %95 = vmatprep.subr.bf16.mxu0 0
  %96 = vmatpush1.bf16.msra.mxu0 0
  %97 = vmatprep.subr.bf16.mxu0 0
  %98 = vmatpush1.bf16.msra.mxu0 0
  %99 = vmatprep.mubr.bf16.mxu0 0
  %100 = vmatmul.mubr.bf16.gmra.mrb[0].mxu0 %v65
  %v101 = vpop.f32.mrb[0].mxu0
  %v102 = vadd.f32 %v44, %v101
  %v103 = vpop.f32.mrb[0].mxu0
  %v104 = vpop.f32.mrb[0].mxu0
  %v105 = vadd.f32 %v44, %v104
  %v106 = vpop.f32.mrb[0].mxu0
  %107 = vdwg.mxu0
  %v108 = vmax.f32 %v102, 0.0
  %v109 = vmax.f32 %v105, 0.0
  %v110 = vpack.c.bf16 %v109, %v108
  %v111 = vld [vmem:[%s3] sm:$0xf]
  %v112 = vld [vmem:[%s3 + $0x4] sm:$0xf]
  %v113 = vld [vmem:[%s3 + $0x8] sm:$0xf]
  %v114 = vld [vmem:[%s3 + $0xc] sm:$0xf]
  %v115 = vld [vmem:[%s3 + $0x10] sm:$0xf]
  %v116 = vld [vmem:[%s3 + $0x14] sm:$0xf]
  %v117 = vld [vmem:[%s3 + $0x18] sm:$0xf]
  %v118 = vld [vmem:[%s3 + $0x1c] sm:$0xf]
  %v119 = vld [vmem:[%s4] sm:$0x1]
  %v121 = vlaneseq
  %v122 = vshrl.u32 %v121, 7
  %v123 = vsub.s32 0, %v122
  %v124 = vrot.slane %v119, %v123
  %v134 = vunpack.c.l.b16 %v111
  %v135 = vunpack.c.l.b16 %v112
  %v136 = vunpack.c.l.b16 %v113
  %v137 = vunpack.c.l.b16 %v114
  %v138 = vunpack.c.l.b16 %v115
  %v139 = vunpack.c.l.b16 %v116
  %v140 = vunpack.c.l.b16 %v117
  %v141 = vunpack.c.l.b16 %v118
  %v142 = vpack.c.b16 %v135, %v134
  %v143 = vpack.c.b16 %v137, %v136
  %v144 = vpack.c.b16 %v139, %v138
  %v145 = vpack.c.b16 %v141, %v140
  %vm150 = vcmask 523264
  %v152 = vsel %vm150, %v110, 0
  %154 = vmatprep.subr.bf16.mxu0 0
  %155 = vmatpush1.bf16.msra.mxu0 %v142
  %156 = vmatprep.subr.bf16.mxu0 0
  %157 = vmatpush1.bf16.msra.mxu0 %v143
  %158 = vmatprep.subr.bf16.mxu0 0
  %159 = vmatpush1.bf16.msra.mxu0 %v144
  %160 = vmatprep.subr.bf16.mxu0 0
  %161 = vmatpush1.bf16.msra.mxu0 %v145
  %162 = vmatprep.subr.bf16.mxu0 0
  %163 = vmatpush1.bf16.msra.mxu0 0
  %164 = vmatprep.subr.bf16.mxu0 0
  %165 = vmatpush1.bf16.msra.mxu0 0
  %166 = vmatprep.subr.bf16.mxu0 0
  %167 = vmatpush1.bf16.msra.mxu0 0
  %168 = vmatprep.subr.bf16.mxu0 0
  %169 = vmatpush1.bf16.msra.mxu0 0
  %170 = vmatprep.subr.bf16.mxu0 0
  %171 = vmatpush1.bf16.msra.mxu0 0
  %172 = vmatprep.subr.bf16.mxu0 0
  %173 = vmatpush1.bf16.msra.mxu0 0
  %174 = vmatprep.subr.bf16.mxu0 0
  %175 = vmatpush1.bf16.msra.mxu0 0
  %176 = vmatprep.subr.bf16.mxu0 0
  %177 = vmatpush1.bf16.msra.mxu0 0
  %178 = vmatprep.subr.bf16.mxu0 0
  %179 = vmatpush1.bf16.msra.mxu0 0
  %180 = vmatprep.subr.bf16.mxu0 0
  %181 = vmatpush1.bf16.msra.mxu0 0
  %182 = vmatprep.subr.bf16.mxu0 0
  %183 = vmatpush1.bf16.msra.mxu0 0
  %184 = vmatprep.subr.bf16.mxu0 0
  %185 = vmatpush1.bf16.msra.mxu0 0
  %186 = vmatprep.mubr.bf16.mxu0 0
  %187 = vmatmul.mubr.bf16.gmra.mrb[0].mxu0 %v152
  %v188 = vpop.f32.mrb[0].mxu0
  %v189 = vadd.f32 %v124, %v188
  %v190 = vpop.f32.mrb[0].mxu0
  %v191 = vpop.f32.mrb[0].mxu0
  %v192 = vadd.f32 %v124, %v191
  %v193 = vpop.f32.mrb[0].mxu0
  %194 = vdwg.mxu0
  %v195 = vmax.f32 %v189, 0.0
  %v196 = vmax.f32 %v192, 0.0
  %v197 = vpack.c.bf16 %v196, %v195
  %v198 = vld [vmem:[%s5] sm:$0xf]
  %v199 = vld [vmem:[%s5 + $0x4] sm:$0xf]
  %v200 = vld [vmem:[%s5 + $0x8] sm:$0xf]
  %v201 = vld [vmem:[%s5 + $0xc] sm:$0xf]
  %v202 = vld [vmem:[%s5 + $0x10] sm:$0xf]
  %v203 = vld [vmem:[%s5 + $0x14] sm:$0xf]
  %v204 = vld [vmem:[%s5 + $0x18] sm:$0xf]
  %v205 = vld [vmem:[%s5 + $0x1c] sm:$0xf]
  %v206 = vld [vmem:[%s5 + $0x20] sm:$0xf]
  %v207 = vld [vmem:[%s5 + $0x24] sm:$0xf]
  %v208 = vld [vmem:[%s5 + $0x28] sm:$0xf]
  %v209 = vld [vmem:[%s5 + $0x2c] sm:$0xf]
  %v210 = vld [vmem:[%s5 + $0x30] sm:$0xf]
  %v211 = vld [vmem:[%s5 + $0x34] sm:$0xf]
  %v212 = vld [vmem:[%s5 + $0x38] sm:$0xf]
  %v213 = vld [vmem:[%s5 + $0x3c] sm:$0xf]
  %v214 = vld [vmem:[%s6] sm:$0x1]
  %v216 = vlaneseq
  %v217 = vshrl.u32 %v216, 7
  %v218 = vsub.s32 0, %v217
  %v219 = vrot.slane %v214, %v218
  %v237 = vunpack.c.l.b16 %v198
  %v238 = vunpack.c.l.b16 %v199
  %v239 = vunpack.c.l.b16 %v200
  %v240 = vunpack.c.l.b16 %v201
  %v241 = vunpack.c.l.b16 %v202
  %v242 = vunpack.c.l.b16 %v203
  %v243 = vunpack.c.l.b16 %v204
  %v244 = vunpack.c.l.b16 %v205
  %v245 = vunpack.c.l.b16 %v206
  %v246 = vunpack.c.l.b16 %v207
  %v247 = vunpack.c.l.b16 %v208
  %v248 = vunpack.c.l.b16 %v209
  %v249 = vunpack.c.l.b16 %v210
  %v250 = vunpack.c.l.b16 %v211
  %v251 = vunpack.c.l.b16 %v212
  %v252 = vunpack.c.l.b16 %v213
  %v253 = vpack.c.b16 %v238, %v237
  %v254 = vpack.c.b16 %v240, %v239
  %v255 = vpack.c.b16 %v242, %v241
  %v256 = vpack.c.b16 %v244, %v243
  %v257 = vpack.c.b16 %v246, %v245
  %v258 = vpack.c.b16 %v248, %v247
  %v259 = vpack.c.b16 %v250, %v249
  %v260 = vpack.c.b16 %v252, %v251
  %269 = vmatprep.subr.bf16.mxu0 0
  %270 = vmatpush1.bf16.msra.mxu0 %v253
  %271 = vmatprep.subr.bf16.mxu0 0
  %272 = vmatpush1.bf16.msra.mxu0 %v254
  %273 = vmatprep.subr.bf16.mxu0 0
  %274 = vmatpush1.bf16.msra.mxu0 %v255
  %275 = vmatprep.subr.bf16.mxu0 0
  %276 = vmatpush1.bf16.msra.mxu0 %v256
  %277 = vmatprep.subr.bf16.mxu0 0
  %278 = vmatpush1.bf16.msra.mxu0 %v257
  %279 = vmatprep.subr.bf16.mxu0 0
  %280 = vmatpush1.bf16.msra.mxu0 %v258
  %281 = vmatprep.subr.bf16.mxu0 0
  %282 = vmatpush1.bf16.msra.mxu0 %v259
  %283 = vmatprep.subr.bf16.mxu0 0
  %284 = vmatpush1.bf16.msra.mxu0 %v260
  %285 = vmatprep.subr.bf16.mxu0 0
  %286 = vmatpush1.bf16.msra.mxu0 0
  %287 = vmatprep.subr.bf16.mxu0 0
  %288 = vmatpush1.bf16.msra.mxu0 0
  %289 = vmatprep.subr.bf16.mxu0 0
  %290 = vmatpush1.bf16.msra.mxu0 0
  %291 = vmatprep.subr.bf16.mxu0 0
  %292 = vmatpush1.bf16.msra.mxu0 0
  %293 = vmatprep.subr.bf16.mxu0 0
  %294 = vmatpush1.bf16.msra.mxu0 0
  %295 = vmatprep.subr.bf16.mxu0 0
  %296 = vmatpush1.bf16.msra.mxu0 0
  %297 = vmatprep.subr.bf16.mxu0 0
  %298 = vmatpush1.bf16.msra.mxu0 0
  %299 = vmatprep.subr.bf16.mxu0 0
  %300 = vmatpush1.bf16.msra.mxu0 0
  %301 = vmatprep.mubr.bf16.mxu0 0
  %302 = vmatmul.mubr.bf16.gmra.mrb[0].mxu0 %v197
  %v303 = vpop.f32.mrb[0].mxu0
  %v304 = vadd.f32 %v219, %v303
  %v305 = vpop.f32.mrb[0].mxu0
  %v306 = vpop.f32.mrb[0].mxu0
  %v307 = vadd.f32 %v219, %v306
  %v308 = vpop.f32.mrb[0].mxu0
  %309 = vdwg.mxu0
  %v310 = vmul.f32 %v304, %v304
  %v311 = vmul.f32 %v307, %v307
  %v312 = vsel %vm63, %v310, 0.0
  %313 = vadd.xlane.f32.xlu0 %v312
  %v314 = vpop.xlane.xlu0 %313
  %v315 = vsel %vm63, %v311, 0.0
  %316 = vadd.xlane.f32.xlu0 %v315
  %v317 = vpop.xlane.xlu0 %316
  %v318 = vmax.f32 %v314, 1e-24
  %v319 = vmax.f32 %v317, 1e-24
  %v320 = vrsqrt.pop %v318
  %v321 = vrsqrt.pop %v319
  %v322 = vmul.f32 %v304, %v320
  %v323 = vmul.f32 %v307, %v321
  %v324 = vpack.c.bf16 %v323, %v322
  %v325 = vld [vmem:[%s7] sm:$0xf]
  %v326 = vld [vmem:[%s7 + $0x4] sm:$0xf]
  %v327 = vld [vmem:[%s7 + $0x8] sm:$0xf]
  %v328 = vld [vmem:[%s7 + $0xc] sm:$0xf]
  %v329 = vld [vmem:[%s8] sm:$0x1]
  %v331 = vlaneseq
  %v332 = vshrl.u32 %v331, 7
  %v333 = vsub.s32 0, %v332
  %v334 = vrot.slane %v329, %v333
  %v340 = vunpack.c.l.b16 %v325
  %v341 = vunpack.c.l.b16 %v326
  %v342 = vunpack.c.l.b16 %v327
  %v343 = vunpack.c.l.b16 %v328
  %v344 = vpack.c.b16 %v341, %v340
  %v345 = vpack.c.b16 %v343, %v342
  %v349 = vsel %vm63, %v324, 0
  %351 = vmatprep.subr.bf16.mxu0 0
  %352 = vmatpush1.bf16.msra.mxu0 %v344
  %353 = vmatprep.subr.bf16.mxu0 0
  %354 = vmatpush1.bf16.msra.mxu0 %v345
  %355 = vmatprep.subr.bf16.mxu0 0
  %356 = vmatpush1.bf16.msra.mxu0 0
  %357 = vmatprep.subr.bf16.mxu0 0
  %358 = vmatpush1.bf16.msra.mxu0 0
  %359 = vmatprep.subr.bf16.mxu0 0
  %360 = vmatpush1.bf16.msra.mxu0 0
  %361 = vmatprep.subr.bf16.mxu0 0
  %362 = vmatpush1.bf16.msra.mxu0 0
  %363 = vmatprep.subr.bf16.mxu0 0
  %364 = vmatpush1.bf16.msra.mxu0 0
  %365 = vmatprep.subr.bf16.mxu0 0
  %366 = vmatpush1.bf16.msra.mxu0 0
  %367 = vmatprep.subr.bf16.mxu0 0
  %368 = vmatpush1.bf16.msra.mxu0 0
  %369 = vmatprep.subr.bf16.mxu0 0
  %370 = vmatpush1.bf16.msra.mxu0 0
  %371 = vmatprep.subr.bf16.mxu0 0
  %372 = vmatpush1.bf16.msra.mxu0 0
  %373 = vmatprep.subr.bf16.mxu0 0
  %374 = vmatpush1.bf16.msra.mxu0 0
  %375 = vmatprep.subr.bf16.mxu0 0
  %376 = vmatpush1.bf16.msra.mxu0 0
  %377 = vmatprep.subr.bf16.mxu0 0
  %378 = vmatpush1.bf16.msra.mxu0 0
  %379 = vmatprep.subr.bf16.mxu0 0
  %380 = vmatpush1.bf16.msra.mxu0 0
  %381 = vmatprep.subr.bf16.mxu0 0
  %382 = vmatpush1.bf16.msra.mxu0 0
  %383 = vmatprep.mubr.bf16.mxu0 0
  %384 = vmatmul.mubr.bf16.gmra.mrb[0].mxu0 %v349
  %v385 = vpop.f32.mrb[0].mxu0
  %v386 = vadd.f32 %v334, %v385
  %v387 = vpop.f32.mrb[0].mxu0
  %v388 = vpop.f32.mrb[0].mxu0
  %v389 = vadd.f32 %v334, %v388
  %v390 = vpop.f32.mrb[0].mxu0
  %391 = vdwg.mxu0
  %vm392 = vcmask 64512
  %393 = vst.msk [vmem:[%s9] sm:$0xff] %vm392, %v386
  %394 = vst.msk [vmem:[%s9 + $0x8] sm:$0xff] %vm392, %v389
  // Predicated region
  $region38: #{_forward.1} parent=0 // pred_check
    _
  $region39: #{_forward.1} parent=0 // pred_check_branch
    %396 = sbr.rel (0) target = $region41
  $region40: #{_forward.1} parent=0 // pred_region
    _
  $region41: #{_forward.1} parent=0 // pred_fallthru
    _
  // Predicated region
  $region42: #{_forward.1} parent=0 // pred_check
    _
  $region43: #{_forward.1} parent=0 // pred_check_branch
    %398 = sbr.rel (0) target = $region45
  $region44: #{_forward.1} parent=0 // pred_region
    _
  $region45: #{_forward.1} parent=0 // pred_fallthru
    _

</llo_original>
